<compile_context>
chip_gen: v7x
topology: tpu7x:2x2x1
jax: 0.10.0
libtpu: 0.0.40
codegen_flags: <defaults>
</compile_context>

<pallas_src>
import math
import jax
import jax.numpy as jnp
from jax import lax
from jax.experimental import pallas as pl
from jax.experimental.pallas import tpu as pltpu


def _round_up(x, m):
    return ((x + m - 1) // m) * m


def _pick_tile(dim_padded, max_tile, align):
    """Largest multiple of `align` that divides `dim_padded` and is <= max_tile."""
    t = min(max_tile, dim_padded)
    t = max((t // align) * align, align)
    while dim_padded % t != 0:
        t -= align
    return t


# ---------------------------------------------------------------------------
# Kernels
# ---------------------------------------------------------------------------

_NT_DIMS = (((1,), (1,)), ((), ()))   # (TM, TK) x (TN, TK) -> (TM, TN), no transpose


def _noisy_linear_kernel(x_ref, wmu_ref, wsig_ref, ein_ref, eout_ref, b_ref,
                         o_ref, accmu_ref, accsig_ref):
    k = pl.program_id(2)

    @pl.when(k == 0)
    def _():
        accmu_ref[...] = jnp.zeros_like(accmu_ref)
        accsig_ref[...] = jnp.zeros_like(accsig_ref)

    # eps_in folded into the LHS (O(TM*TK) VPU work, f32 on the VPU, bf16 at
    # the MXU).  Both RHS operands are raw bf16 refs.
    x = x_ref[...]                               # (TM, TK) f32
    xe = x * ein_ref[...]                        # (TM, TK) f32, (1, TK) broadcast

    accmu_ref[...] += lax.dot_general(
        x.astype(wmu_ref.dtype), wmu_ref[...], _NT_DIMS,
        preferred_element_type=jnp.float32)
    accsig_ref[...] += lax.dot_general(
        xe.astype(wsig_ref.dtype), wsig_ref[...], _NT_DIMS,
        preferred_element_type=jnp.float32)

    @pl.when(k == pl.num_programs(2) - 1)
    def _():
        # eps_out folded in as a per-column scale once per (i, j) tile;
        # bias is the pre-combined effective bias row.
        o_ref[...] = (accmu_ref[...]
                      + eout_ref[...] * accsig_ref[...]
                      + b_ref[...]).astype(o_ref.dtype)


def _plain_linear_kernel(x_ref, wmu_ref, b_ref, o_ref, acc_ref):
    # Eval-mode path: mu-only linear, no noise streams at all.
    k = pl.program_id(2)

    @pl.when(k == 0)
    def _():
        acc_ref[...] = jnp.zeros_like(acc_ref)

    acc_ref[...] += lax.dot_general(
        x_ref[...].astype(wmu_ref.dtype), wmu_ref[...], _NT_DIMS,
        preferred_element_type=jnp.float32)

    @pl.when(k == pl.num_programs(2) - 1)
    def _():
        o_ref[...] = (acc_ref[...] + b_ref[...]).astype(o_ref.dtype)


# ---------------------------------------------------------------------------
# Wrapper
# ---------------------------------------------------------------------------

def noisy_linear(x, weight_mu, weight_sigma, bias_mu, bias_sigma,
                 eps_in, eps_out, *, training=True,
                 tm=256, tn=512, tk=1024, weight_dtype=jnp.bfloat16):
    """Pallas TPU NoisyLinear forward.

    x:            (batch, in_features)
    weight_mu:    (out_features, in_features)
    weight_sigma: (out_features, in_features)
    bias_mu:      (out_features,)
    bias_sigma:   (out_features,)
    eps_in:       (in_features,)   factorized noise (weight_epsilon = outer(eps_out, eps_in))
    eps_out:      (out_features,)  factorized noise (bias_epsilon = eps_out)

    Weights are streamed to the MXU as `weight_dtype` (bf16 by default, halving
    the dominant HBM traffic); accumulation is f32.  Default tiles use ~8 MiB
    of double-buffered VMEM (fits v5e's 16 MiB scoped default and v6e/v7x).
    """
    batch, in_features = x.shape
    out_features = weight_mu.shape[0]
    dtype = x.dtype

    # Pad to TPU-friendly multiples (sublane 8 / lane 128); pick tile sizes
    # that divide the padded dims so K/N are never over-padded (no wasted
    # weight bandwidth).
    mp = _round_up(batch, 8)
    kp = _round_up(in_features, 128)
    np_ = _round_up(out_features, 128)

    tm = _pick_tile(mp, tm, 8)
    tk = _pick_tile(kp, tk, 128)
    tn = _pick_tile(np_, tn, 128)

    # v7x has 2 TensorCores sharing the "parallel" grid axes: make sure there
    # are at least 2 parallel (M, N) tiles when the problem allows it.
    if (mp // tm) * (np_ // tn) < 2:
        if np_ // 128 >= 2:
            tn = _pick_tile(np_, np_ // 2, 128)
        elif mp // 8 >= 2:
            tm = _pick_tile(mp, mp // 2, 8)

    def pad2(a, rows, cols):
        pr, pc = rows - a.shape[0], cols - a.shape[1]
        if pr == 0 and pc == 0:
            return a
        return jnp.pad(a, ((0, pr), (0, pc)))

    xp = pad2(x, mp, kp)                                              # f32
    wmup = pad2(weight_mu.astype(weight_dtype), np_, kp)              # bf16 stream

    # Effective bias precomputed once (O(N) wrapper op): drops bias_sigma /
    # bias_epsilon streams and the per-tile bias reconstruction.
    if training:
        bias_eff = bias_mu + bias_sigma * eps_out
    else:
        bias_eff = bias_mu
    bp = pad2(bias_eff.astype(jnp.float32).reshape(1, -1), 1, np_)    # (1, Np) f32

    grid = (mp // tm, np_ // tn, kp // tk)

    x_spec = pl.BlockSpec((tm, tk), lambda i, j, k: (i, k))
    w_spec = pl.BlockSpec((tn, tk), lambda i, j, k: (j, k))
    krow_spec = pl.BlockSpec((1, tk), lambda i, j, k: (0, k))
    nrow_spec = pl.BlockSpec((1, tn), lambda i, j, k: (0, j))
    out_spec = pl.BlockSpec((tm, tn), lambda i, j, k: (i, j))

    compiler_params = pltpu.CompilerParams(
        dimension_semantics=("parallel", "parallel", "arbitrary"))

    if training:
        wsigp = pad2(weight_sigma.astype(weight_dtype), np_, kp)      # bf16 stream
        einp = pad2(eps_in.astype(jnp.float32).reshape(1, -1), 1, kp)    # (1, Kp)
        eoutp = pad2(eps_out.astype(jnp.float32).reshape(1, -1), 1, np_)  # (1, Np)

        out = pl.pallas_call(
            _noisy_linear_kernel,
            out_shape=jax.ShapeDtypeStruct((mp, np_), dtype),
            grid_spec=pltpu.PrefetchScalarGridSpec(
                num_scalar_prefetch=0,
                grid=grid,
                in_specs=[
                    x_spec,        # x
                    w_spec,        # weight_mu   (bf16)
                    w_spec,        # weight_sigma (bf16)
                    krow_spec,     # eps_in  row (1, tk)
                    nrow_spec,     # eps_out row (1, tn)
                    nrow_spec,     # effective bias row (1, tn)
                ],
                out_specs=out_spec,
                scratch_shapes=[pltpu.VMEM((tm, tn), jnp.float32),
                                pltpu.VMEM((tm, tn), jnp.float32)]),
            compiler_params=compiler_params,
        )(xp, wmup, wsigp, einp, eoutp, bp)
    else:
        out = pl.pallas_call(
            _plain_linear_kernel,
            out_shape=jax.ShapeDtypeStruct((mp, np_), dtype),
            grid_spec=pltpu.PrefetchScalarGridSpec(
                num_scalar_prefetch=0,
                grid=grid,
                in_specs=[x_spec, w_spec, nrow_spec],
                out_specs=out_spec,
                scratch_shapes=[pltpu.VMEM((tm, tn), jnp.float32)]),
            compiler_params=compiler_params,
        )(xp, wmup, bp)

    return out[:batch, :out_features]


# ---------------------------------------------------------------------------
# Parameter / noise initialization (reproduces NoisyLinear.__init__ + reset_noise)
# ---------------------------------------------------------------------------

def init_noisy_linear_params(key, in_features, out_features):
    k_wmu, k_bmu, k_ein, k_eout = jax.random.split(key, 4)

    mu_range = 1.0 / math.sqrt(in_features)
    weight_sigma_value = 0.5 / math.sqrt(in_features)
    bias_sigma_value = 0.5 / math.sqrt(out_features)

    weight_mu = jax.random.uniform(
        k_wmu, (out_features, in_features), jnp.float32, -mu_range, mu_range)
    weight_sigma = jnp.full((out_features, in_features), weight_sigma_value,
                            jnp.float32)
    bias_mu = jax.random.uniform(
        k_bmu, (out_features,), jnp.float32, -mu_range, mu_range)
    bias_sigma = jnp.full((out_features,), bias_sigma_value, jnp.float32)

    # Factorized Gaussian noise: f(x) = sign(x) * sqrt(|x|)
    def f(v):
        return jnp.sign(v) * jnp.sqrt(jnp.abs(v))

    eps_in = f(jax.random.normal(k_ein, (in_features,), jnp.float32))
    eps_out = f(jax.random.normal(k_eout, (out_features,), jnp.float32))

    return weight_mu, weight_sigma, bias_mu, bias_sigma, eps_in, eps_out


def _reference(x, weight_mu, weight_sigma, bias_mu, bias_sigma,
               eps_in, eps_out, training):
    if training:
        w = weight_mu + weight_sigma * jnp.outer(eps_out, eps_in)
        b = bias_mu + bias_sigma * eps_out
    else:
        w = weight_mu
        b = bias_mu
    return x @ w.T + b


if __name__ == "__main__":
    key = jax.random.PRNGKey(0)

    # bf16 weight streaming => ~1e-2 relative deviation from the f32 reference.
    ATOL, RTOL = 5e-2, 5e-2

    # --- Case 1: small demo shapes (exercises the padding path), training mode
    batch, in_features, out_features = 8, 32, 64
    k_params, k_x, key = jax.random.split(key, 3)
    params = init_noisy_linear_params(k_params, in_features, out_features)
    x = jax.random.normal(k_x, (batch, in_features), jnp.float32)

    out_train = jax.block_until_ready(noisy_linear(x, *params, training=True))
    exp_train = _reference(x, *params, training=True)
    assert out_train.shape == (batch, out_features)
    assert jnp.allclose(out_train, exp_train, atol=ATOL, rtol=RTOL)

    # --- Case 2: same shapes, eval mode (mu-only kernel path)
    out_eval = jax.block_until_ready(noisy_linear(x, *params, training=False))
    exp_eval = _reference(x, *params, training=False)
    assert jnp.allclose(out_eval, exp_eval, atol=ATOL, rtol=RTOL)

    # --- Case 3: K-tiled shapes (multi-step reduction, multiple N tiles,
    #             non-power-of-two K exercising the divisor-clamped tk)
    batch2, in2, out2 = 16, 1536, 256
    k_params2, k_x2 = jax.random.split(key)
    params2 = init_noisy_linear_params(k_params2, in2, out2)
    x2 = jax.random.normal(k_x2, (batch2, in2), jnp.float32)

    out2_train = jax.block_until_ready(noisy_linear(x2, *params2, training=True))
    exp2_train = _reference(x2, *params2, training=True)
    assert out2_train.shape == (batch2, out2)
    assert jnp.allclose(out2_train, exp2_train, atol=ATOL, rtol=RTOL)

    out2_eval = jax.block_until_ready(noisy_linear(x2, *params2, training=False))
    exp2_eval = _reference(x2, *params2, training=False)
    assert jnp.allclose(out2_eval, exp2_eval, atol=ATOL, rtol=RTOL)

    print("KERNEL_OK")
</pallas_src>

<mosaic_0001>
module attributes {stable_mosaic.version = 11 : i64} {
  func.func @_noisy_linear_kernel(%arg0: i32, %arg1: i32, %arg2: i32, %arg3: memref<8x128xf32, #tpu.memory_space<vmem>>, %arg4: memref<128x128xbf16, #tpu.memory_space<vmem>>, %arg5: memref<128x128xbf16, #tpu.memory_space<vmem>>, %arg6: memref<1x128xf32, #tpu.memory_space<vmem>>, %arg7: memref<1x128xf32, #tpu.memory_space<vmem>>, %arg8: memref<1x128xf32, #tpu.memory_space<vmem>>, %arg9: memref<8x128xf32, #tpu.memory_space<vmem>>, %arg10: memref<8x128xf32, #tpu.memory_space<vmem>>, %arg11: memref<8x128xf32, #tpu.memory_space<vmem>>) attributes {dimension_semantics = [#tpu.dimension_semantics<parallel>, #tpu.dimension_semantics<parallel>, #tpu.dimension_semantics<arbitrary>], iteration_bounds = array<i64: 1, 1, 1>, scalar_prefetch = 0 : i64, scratch_operands = 2 : i64, tpu.core_type = #tpu.core_type<tc>, window_params = [{transform_indices = @transform_0, window_bounds = array<i64: 8, 128>}, {transform_indices = @transform_1, window_bounds = array<i64: 128, 128>}, {transform_indices = @transform_2, window_bounds = array<i64: 128, 128>}, {transform_indices = @transform_3, window_bounds = array<i64: 1, 128>}, {transform_indices = @transform_4, window_bounds = array<i64: 1, 128>}, {transform_indices = @transform_5, window_bounds = array<i64: 1, 128>}, {transform_indices = @transform_6, window_bounds = array<i64: 8, 128>}]} {
    %c0_i32 = arith.constant 0 : i32
    %0 = arith.cmpi eq, %arg2, %c0_i32 : i32
    %1 = arith.extui %0 : i1 to i32
    %c0_i32_0 = arith.constant 0 : i32
    %2 = arith.cmpi ne, %1, %c0_i32_0 : i32
    scf.if %2 {
      %cst_19 = arith.constant 0.000000e+00 : f32
      %22 = vector.broadcast %cst_19 : f32 to vector<8x128xf32>
      %c0_20 = arith.constant 0 : index
      %c0_21 = arith.constant 0 : index
      %23 = vector.load %arg10[%c0_20, %c0_21] : memref<8x128xf32, #tpu.memory_space<vmem>>, vector<8x128xf32>
      tpu.vector_store %arg10[%c0_20, %c0_21], %22 {strides = array<i32>} : memref<8x128xf32, #tpu.memory_space<vmem>>, vector<8x128xf32>,
      %cst_22 = arith.constant 0.000000e+00 : f32
      %24 = vector.broadcast %cst_22 : f32 to vector<8x128xf32>
      %c0_23 = arith.constant 0 : index
      %c0_24 = arith.constant 0 : index
      %25 = vector.load %arg11[%c0_23, %c0_24] : memref<8x128xf32, #tpu.memory_space<vmem>>, vector<8x128xf32>
      tpu.vector_store %arg11[%c0_23, %c0_24], %24 {strides = array<i32>} : memref<8x128xf32, #tpu.memory_space<vmem>>, vector<8x128xf32>,
    } else {
    }
    %c0 = arith.constant 0 : index
    %c0_1 = arith.constant 0 : index
    %3 = vector.load %arg3[%c0, %c0_1] : memref<8x128xf32, #tpu.memory_space<vmem>>, vector<8x128xf32>
    %c0_2 = arith.constant 0 : index
    %c0_3 = arith.constant 0 : index
    %4 = vector.load %arg6[%c0_2, %c0_3] : memref<1x128xf32, #tpu.memory_space<vmem>>, vector<1x128xf32>
    %5 = vector.broadcast %4 : vector<1x128xf32> to vector<8x128xf32>
    %6 = arith.mulf %3, %5 : vector<8x128xf32>
    %c0_4 = arith.constant 0 : index
    %c0_5 = arith.constant 0 : index
    %7 = vector.load %arg10[%c0_4, %c0_5] : memref<8x128xf32, #tpu.memory_space<vmem>>, vector<8x128xf32>
    %8 = arith.truncf %3 : vector<8x128xf32> to vector<8x128xbf16>
    %c0_6 = arith.constant 0 : index
    %c0_7 = arith.constant 0 : index
    %9 = vector.load %arg4[%c0_6, %c0_7] : memref<128x128xbf16, #tpu.memory_space<vmem>>, vector<128x128xbf16>
    %cst = arith.constant dense<0.000000e+00> : vector<8x128xf32>
    %10 = tpu.matmul %8, %9, %cst {dimension_numbers = #tpu.dot_dimension_numbers<[1], [1], [0], [0], [0, 0, 1, 0], [], []>} : vector<8x128xbf16>, vector<128x128xbf16>, vector<8x128xf32> -> vector<8x128xf32>
    %11 = arith.addf %7, %10 : vector<8x128xf32>
    %c0_8 = arith.constant 0 : index
    %c0_9 = arith.constant 0 : index
    %12 = vector.load %arg10[%c0_8, %c0_9] : memref<8x128xf32, #tpu.memory_space<vmem>>, vector<8x128xf32>
    tpu.vector_store %arg10[%c0_8, %c0_9], %11 {strides = array<i32>} : memref<8x128xf32, #tpu.memory_space<vmem>>, vector<8x128xf32>,
    %c0_10 = arith.constant 0 : index
    %c0_11 = arith.constant 0 : index
    %13 = vector.load %arg11[%c0_10, %c0_11] : memref<8x128xf32, #tpu.memory_space<vmem>>, vector<8x128xf32>
    %14 = arith.truncf %6 : vector<8x128xf32> to vector<8x128xbf16>
    %c0_12 = arith.constant 0 : index
    %c0_13 = arith.constant 0 : index
    %15 = vector.load %arg5[%c0_12, %c0_13] : memref<128x128xbf16, #tpu.memory_space<vmem>>, vector<128x128xbf16>
    %cst_14 = arith.constant dense<0.000000e+00> : vector<8x128xf32>
    %16 = tpu.matmul %14, %15, %cst_14 {dimension_numbers = #tpu.dot_dimension_numbers<[1], [1], [0], [0], [0, 0, 1, 0], [], []>} : vector<8x128xbf16>, vector<128x128xbf16>, vector<8x128xf32> -> vector<8x128xf32>
    %17 = arith.addf %13, %16 : vector<8x128xf32>
    %c0_15 = arith.constant 0 : index
    %c0_16 = arith.constant 0 : index
    %18 = vector.load %arg11[%c0_15, %c0_16] : memref<8x128xf32, #tpu.memory_space<vmem>>, vector<8x128xf32>
    tpu.vector_store %arg11[%c0_15, %c0_16], %17 {strides = array<i32>} : memref<8x128xf32, #tpu.memory_space<vmem>>, vector<8x128xf32>,
    %c0_i32_17 = arith.constant 0 : i32
    %19 = arith.cmpi eq, %arg2, %c0_i32_17 : i32
    %20 = arith.extui %19 : i1 to i32
    %c0_i32_18 = arith.constant 0 : i32
    %21 = arith.cmpi ne, %20, %c0_i32_18 : i32
    scf.if %21 {
      %c0_19 = arith.constant 0 : index
      %c0_20 = arith.constant 0 : index
      %22 = vector.load %arg10[%c0_19, %c0_20] : memref<8x128xf32, #tpu.memory_space<vmem>>, vector<8x128xf32>
      %c0_21 = arith.constant 0 : index
      %c0_22 = arith.constant 0 : index
      %23 = vector.load %arg7[%c0_21, %c0_22] : memref<1x128xf32, #tpu.memory_space<vmem>>, vector<1x128xf32>
      %c0_23 = arith.constant 0 : index
      %c0_24 = arith.constant 0 : index
      %24 = vector.load %arg11[%c0_23, %c0_24] : memref<8x128xf32, #tpu.memory_space<vmem>>, vector<8x128xf32>
      %25 = vector.broadcast %23 : vector<1x128xf32> to vector<8x128xf32>
      %26 = arith.mulf %25, %24 : vector<8x128xf32>
      %27 = arith.addf %22, %26 : vector<8x128xf32>
      %c0_25 = arith.constant 0 : index
      %c0_26 = arith.constant 0 : index
      %28 = vector.load %arg8[%c0_25, %c0_26] : memref<1x128xf32, #tpu.memory_space<vmem>>, vector<1x128xf32>
      %29 = vector.broadcast %28 : vector<1x128xf32> to vector<8x128xf32>
      %30 = arith.addf %27, %29 : vector<8x128xf32>
      %c0_27 = arith.constant 0 : index
      %c0_28 = arith.constant 0 : index
      %31 = vector.load %arg9[%c0_27, %c0_28] : memref<8x128xf32, #tpu.memory_space<vmem>>, vector<8x128xf32>
      tpu.vector_store %arg9[%c0_27, %c0_28], %30 {strides = array<i32>} : memref<8x128xf32, #tpu.memory_space<vmem>>, vector<8x128xf32>,
    } else {
    }
    return
  }
  func.func @transform_0(%arg0: i32, %arg1: i32, %arg2: i32) -> (i32, i32) {
    %c0_i32 = arith.constant 0 : i32
    return %arg0, %arg2 : i32, i32
  }
  func.func @transform_1(%arg0: i32, %arg1: i32, %arg2: i32) -> (i32, i32) {
    %c0_i32 = arith.constant 0 : i32
    return %arg1, %arg2 : i32, i32
  }
  func.func @transform_2(%arg0: i32, %arg1: i32, %arg2: i32) -> (i32, i32) {
    %c0_i32 = arith.constant 0 : i32
    return %arg1, %arg2 : i32, i32
  }
  func.func @transform_3(%arg0: i32, %arg1: i32, %arg2: i32) -> (i32, i32) {
    %c0_i32 = arith.constant 0 : i32
    %c0_i32_0 = arith.constant 0 : i32
    return %c0_i32, %arg2 : i32, i32
  }
  func.func @transform_4(%arg0: i32, %arg1: i32, %arg2: i32) -> (i32, i32) {
    %c0_i32 = arith.constant 0 : i32
    %c0_i32_0 = arith.constant 0 : i32
    return %c0_i32, %arg1 : i32, i32
  }
  func.func @transform_5(%arg0: i32, %arg1: i32, %arg2: i32) -> (i32, i32) {
    %c0_i32 = arith.constant 0 : i32
    %c0_i32_0 = arith.constant 0 : i32
    return %c0_i32, %arg1 : i32, i32
  }
  func.func @transform_6(%arg0: i32, %arg1: i32, %arg2: i32) -> (i32, i32) {
    %c0_i32 = arith.constant 0 : i32
    return %arg0, %arg1 : i32, i32
  }
}

</mosaic_0001>

<llo_original>
// kernel: tpu_custom_call.1
$region0: #{tpu_custom_call.1}
  #allocation0 [shape = 'u32[]', space=smem, size = 0x4, offset = 0x4, fixed_abs, tag = 'smem constant byte address 0x4 - core index']
  #allocation1 [shape = 'u32[144,128]{1,0:T(1,128)}', space=vmem, size = 0x12000, scoped, tag = 'internal scratch']
  #allocation2 [shape = 'f32[8,128]{1,0:T(8,128)}', space=vmem, size = 0x1000, scoped, tag = 'scratch operand']
  #allocation3 [shape = 'f32[8,128]{1,0:T(8,128)}', space=vmem, size = 0x1000, scoped, tag = 'scratch operand']
  %s0 = inlined_call_operand.hbm [shape: f32[8,128], index: 0, kind: input, shape index: {}]
  %s1 = inlined_call_operand.hbm [shape: bf16[128,128], index: 1, kind: input, shape index: {}]
  %s2 = inlined_call_operand.hbm [shape: bf16[128,128], index: 2, kind: input, shape index: {}]
  %s3 = inlined_call_operand.vmem [shape: f32[1,128], index: 3, kind: input, shape index: {}]
  %s4 = inlined_call_operand.vmem [shape: f32[1,128], index: 4, kind: input, shape index: {}]
  %s5 = inlined_call_operand.vmem [shape: f32[1,128], index: 5, kind: input, shape index: {}]
  %s6 = inlined_call_operand.hbm [shape: f32[8,128], index: 6, kind: output, shape index: {}]
  %s7 = sld [smem:[#allocation0]]
  $region54: #{tpu_custom_call.1} parent=0
    _
  %s9 = ssub.s32 1, %s7
  %s10 = scalar_select 0, %s9, %s7
  $region1: #{tpu_custom_call.1} parent=0
    #allocation4 [shape = 'u8[4096]{0}', space=vmem, size = 0x1000, scoped, tag = 'input window, operand 0, single buffered']
    #allocation5 [shape = 's32[1]{0}', space=sflag, size = 0x4, scoped, tag = 'scoped memory for tpu_custom_call.1']
    #allocation6 [shape = 's32[1]{0}', space=sflag, size = 0x4, scoped, tag = 'scoped memory for tpu_custom_call.1']
    #allocation7 [shape = 'u8[32768]{0}', space=vmem, size = 0x8000, scoped, tag = 'input window, operand 1, single buffered']
    #allocation8 [shape = 's32[1]{0}', space=sflag, size = 0x4, scoped, tag = 'scoped memory for tpu_custom_call.1']
    #allocation9 [shape = 'u8[32768]{0}', space=vmem, size = 0x8000, scoped, tag = 'input window, operand 2, single buffered']
    #allocation10 [shape = 'u8[4096]{0}', space=vmem, size = 0x1000, scoped, tag = 'output window, operand 0, single buffered']
    %11 = vsyncpa [#allocation5], 0
    %12 = vsyncpa [#allocation8], 0
    %13 = vsyncpa [#allocation6], 0
    // Predicated region
    $region2: #{tpu_custom_call.1} parent=1 // pred_check
      _
    $region3: #{tpu_custom_call.1} parent=1 // pred_check_branch
      %15 = sbr.rel (0) target = $region5
    $region4: #{tpu_custom_call.1} parent=1 // pred_region
      %s17 = ssub.s32 128, 128
      %18 = vsyncadd [#allocation5], %s17
      %s20 = sshll.u32 [#allocation4], 4
      %s21 = int_to_ptr.vmem [resolvable:$true] %s20
      %23 = dma.hbm_to_vmem [thread:$0]  %s0, 128, %s21, [#allocation5]
    $region5: #{tpu_custom_call.1} parent=1 // pred_fallthru
      _
    // Predicated region
    $region6: #{tpu_custom_call.1} parent=1 // pred_check
      _
    $region7: #{tpu_custom_call.1} parent=1 // pred_check_branch
      %25 = sbr.rel (0) target = $region9
    $region8: #{tpu_custom_call.1} parent=1 // pred_region
      %s27 = ssub.s32 1024, 1024
      %28 = vsyncadd [#allocation8], %s27
      %s29 = sshll.u32 [#allocation7], 4
      %s30 = int_to_ptr.vmem [resolvable:$true] %s29
      %35 = dma.hbm_to_vmem [thread:$0]  %s1, 1024, %s30, [#allocation8], 64, 64, 4
    $region9: #{tpu_custom_call.1} parent=1 // pred_fallthru
      _
    // Predicated region
    $region10: #{tpu_custom_call.1} parent=1 // pred_check
      _
    $region11: #{tpu_custom_call.1} parent=1 // pred_check_branch
      %37 = sbr.rel (0) target = $region13
    $region12: #{tpu_custom_call.1} parent=1 // pred_region
      %s39 = ssub.s32 1024, 1024
      %40 = vsyncadd [#allocation8], %s39
      %s41 = sshll.u32 [#allocation9], 4
      %s42 = int_to_ptr.vmem [resolvable:$true] %s41
      %47 = dma.hbm_to_vmem [thread:$0]  %s2, 1024, %s42, [#allocation8], 64, 64, 4
    $region13: #{tpu_custom_call.1} parent=1 // pred_fallthru
      _
    // Predicated region
    $region14: #{tpu_custom_call.1} parent=1 // pred_check
      _
    $region15: #{tpu_custom_call.1} parent=1 // pred_check_branch
      %49 = sbr.rel (0) target = $region17
    $region16: #{tpu_custom_call.1} parent=1 // pred_region
      _
    $region17: #{tpu_custom_call.1} parent=1 // pred_fallthru
      _
    // Predicated region
    $region18: #{tpu_custom_call.1} parent=1 // pred_check
      _
    $region19: #{tpu_custom_call.1} parent=1 // pred_check_branch
      %51 = sbr.rel (0) target = $region21
    $region20: #{tpu_custom_call.1} parent=1 // pred_region
      _
    $region21: #{tpu_custom_call.1} parent=1 // pred_fallthru
      _
    // Predicated region
    $region22: #{tpu_custom_call.1} parent=1 // pred_check
      _
    $region23: #{tpu_custom_call.1} parent=1 // pred_check_branch
      %53 = sbr.rel (0) target = $region25
    $region24: #{tpu_custom_call.1} parent=1 // pred_region
      _
    $region25: #{tpu_custom_call.1} parent=1 // pred_fallthru
      _
    // Predicated region
    $region26: #{tpu_custom_call.1} parent=1 // pred_check
      _
    $region27: #{tpu_custom_call.1} parent=1 // pred_check_branch
      %55 = sbr.rel (0) target = $region29
    $region28: #{tpu_custom_call.1} parent=1 // pred_region
      %56 = dma.done [#allocation5], 128
    $region29: #{tpu_custom_call.1} parent=1 // pred_fallthru
      _
    // Predicated region
    $region30: #{tpu_custom_call.1} parent=1 // pred_check
      _
    $region31: #{tpu_custom_call.1} parent=1 // pred_check_branch
      %58 = sbr.rel (0) target = $region33
    $region32: #{tpu_custom_call.1} parent=1 // pred_region
      %59 = dma.done [#allocation8], 1024
    $region33: #{tpu_custom_call.1} parent=1 // pred_fallthru
      _
    // Predicated region
    $region34: #{tpu_custom_call.1} parent=1 // pred_check
      _
    $region35: #{tpu_custom_call.1} parent=1 // pred_check_branch
      %61 = sbr.rel (0) target = $region37
    $region36: #{tpu_custom_call.1} parent=1 // pred_region
      %62 = dma.done [#allocation8], 1024
    $region37: #{tpu_custom_call.1} parent=1 // pred_fallthru
      _
    %p64 = scmp.eq.s32.totalorder 0, 0
    // Predicated region
    $region38: #{tpu_custom_call.1} parent=1 // pred_check
      %p65 = pneg %p64
    $region39: #{tpu_custom_call.1} parent=1 // pred_check_branch
      %67 = sbr.rel (%p65) target = $region41
    $region40: #{tpu_custom_call.1} parent=1 // pred_region
      %68 = vst [vmem:[#allocation2] sm:$0xff] 0.0
      %69 = vst [vmem:[#allocation3] sm:$0xff] 0.0
    $region41: #{tpu_custom_call.1} parent=1 // pred_fallthru
      _
    %v70 = vld [vmem:[#allocation4] sm:$0xff]
    %v71 = vld [vmem:[%s3] sm:$0x1]
    %v73 = vlaneseq
    %v74 = vshrl.u32 %v73, 7
    %v75 = vsub.s32 0, %v74
    %v76 = vrot.slane %v71, %v75
    %v78 = vmul.f32 %v70, %v76
    %v79 = vld [vmem:[#allocation2] sm:$0xff]
    %v80 = vpack.c.bf16 %v70, %v70
    %v81 = vld [vmem:[#allocation7] sm:$0xf]
    %v82 = vld [vmem:[#allocation7 + $0x4] sm:$0xf]
    %v83 = vld [vmem:[#allocation7 + $0x8] sm:$0xf]
    %v84 = vld [vmem:[#allocation7 + $0xc] sm:$0xf]
    %v85 = vld [vmem:[#allocation7 + $0x10] sm:$0xf]
    %v86 = vld [vmem:[#allocation7 + $0x14] sm:$0xf]
    %v87 = vld [vmem:[#allocation7 + $0x18] sm:$0xf]
    %v88 = vld [vmem:[#allocation7 + $0x1c] sm:$0xf]
    %v89 = vld [vmem:[#allocation7 + $0x20] sm:$0xf]
    %v90 = vld [vmem:[#allocation7 + $0x24] sm:$0xf]
    %v91 = vld [vmem:[#allocation7 + $0x28] sm:$0xf]
    %v92 = vld [vmem:[#allocation7 + $0x2c] sm:$0xf]
    %v93 = vld [vmem:[#allocation7 + $0x30] sm:$0xf]
    %v94 = vld [vmem:[#allocation7 + $0x34] sm:$0xf]
    %v95 = vld [vmem:[#allocation7 + $0x38] sm:$0xf]
    %v96 = vld [vmem:[#allocation7 + $0x3c] sm:$0xf]
    %v113 = vunpack.c.l.b16 %v81
    %v114 = vunpack.c.l.b16 %v82
    %v115 = vunpack.c.l.b16 %v83
    %v116 = vunpack.c.l.b16 %v84
    %v117 = vunpack.c.l.b16 %v85
    %v118 = vunpack.c.l.b16 %v86
    %v119 = vunpack.c.l.b16 %v87
    %v120 = vunpack.c.l.b16 %v88
    %v121 = vunpack.c.l.b16 %v89
    %v122 = vunpack.c.l.b16 %v90
    %v123 = vunpack.c.l.b16 %v91
    %v124 = vunpack.c.l.b16 %v92
    %v125 = vunpack.c.l.b16 %v93
    %v126 = vunpack.c.l.b16 %v94
    %v127 = vunpack.c.l.b16 %v95
    %v128 = vunpack.c.l.b16 %v96
    %v129 = vpack.c.b16 %v114, %v113
    %v130 = vpack.c.b16 %v116, %v115
    %v131 = vpack.c.b16 %v118, %v117
    %v132 = vpack.c.b16 %v120, %v119
    %v133 = vpack.c.b16 %v122, %v121
    %v134 = vpack.c.b16 %v124, %v123
    %v135 = vpack.c.b16 %v126, %v125
    %v136 = vpack.c.b16 %v128, %v127
    %145 = vmatprep.subr.bf16.mxu0 0
    %146 = vmatpush1.bf16.xpose.msra.mxu0 %v129
    %147 = vmatprep.subr.bf16.mxu0 0
    %148 = vmatpush1.bf16.xpose.msra.mxu0 %v130
    %149 = vmatprep.subr.bf16.mxu0 0
    %150 = vmatpush1.bf16.xpose.msra.mxu0 %v131
    %151 = vmatprep.subr.bf16.mxu0 0
    %152 = vmatpush1.bf16.xpose.msra.mxu0 %v132
    %153 = vmatprep.subr.bf16.mxu0 0
    %154 = vmatpush1.bf16.xpose.msra.mxu0 %v133
    %155 = vmatprep.subr.bf16.mxu0 0
    %156 = vmatpush1.bf16.xpose.msra.mxu0 %v134
    %157 = vmatprep.subr.bf16.mxu0 0
    %158 = vmatpush1.bf16.xpose.msra.mxu0 %v135
    %159 = vmatprep.subr.bf16.mxu0 0
    %160 = vmatpush1.bf16.xpose.msra.mxu0 %v136
    %161 = vmatprep.subr.bf16.mxu0 0
    %162 = vmatpush1.bf16.xpose.msra.mxu0 0
    %163 = vmatprep.subr.bf16.mxu0 0
    %164 = vmatpush1.bf16.xpose.msra.mxu0 0
    %165 = vmatprep.subr.bf16.mxu0 0
    %166 = vmatpush1.bf16.xpose.msra.mxu0 0
    %167 = vmatprep.subr.bf16.mxu0 0
    %168 = vmatpush1.bf16.xpose.msra.mxu0 0
    %169 = vmatprep.subr.bf16.mxu0 0
    %170 = vmatpush1.bf16.xpose.msra.mxu0 0
    %171 = vmatprep.subr.bf16.mxu0 0
    %172 = vmatpush1.bf16.xpose.msra.mxu0 0
    %173 = vmatprep.subr.bf16.mxu0 0
    %174 = vmatpush1.bf16.xpose.msra.mxu0 0
    %175 = vmatprep.subr.bf16.mxu0 0
    %176 = vmatpush1.bf16.xpose.msra.mxu0 0
    %177 = vmatprep.mubr.bf16.mxu0 0
    %178 = vmatmul.mubr.bf16.gmra.mrb[0].mxu0 %v80
    %v179 = vpop.f32.mrb[0].mxu0
    %v180 = vadd.f32 0.0, %v179
    %v181 = vpop.f32.mrb[0].mxu0
    %v182 = vpop.f32.mrb[0].mxu0
    %v183 = vpop.f32.mrb[0].mxu0
    %184 = vdwg.mxu0
    %v185 = vadd.f32 %v79, %v180
    %186 = vst [vmem:[#allocation2] sm:$0xff] %v185
    %v187 = vld [vmem:[#allocation3] sm:$0xff]
    %v188 = vpack.c.bf16 %v78, %v78
    %v189 = vld [vmem:[#allocation9] sm:$0xf]
    %v190 = vld [vmem:[#allocation9 + $0x4] sm:$0xf]
    %v191 = vld [vmem:[#allocation9 + $0x8] sm:$0xf]
    %v192 = vld [vmem:[#allocation9 + $0xc] sm:$0xf]
    %v193 = vld [vmem:[#allocation9 + $0x10] sm:$0xf]
    %v194 = vld [vmem:[#allocation9 + $0x14] sm:$0xf]
    %v195 = vld [vmem:[#allocation9 + $0x18] sm:$0xf]
    %v196 = vld [vmem:[#allocation9 + $0x1c] sm:$0xf]
    %v197 = vld [vmem:[#allocation9 + $0x20] sm:$0xf]
    %v198 = vld [vmem:[#allocation9 + $0x24] sm:$0xf]
    %v199 = vld [vmem:[#allocation9 + $0x28] sm:$0xf]
    %v200 = vld [vmem:[#allocation9 + $0x2c] sm:$0xf]
    %v201 = vld [vmem:[#allocation9 + $0x30] sm:$0xf]
    %v202 = vld [vmem:[#allocation9 + $0x34] sm:$0xf]
    %v203 = vld [vmem:[#allocation9 + $0x38] sm:$0xf]
    %v204 = vld [vmem:[#allocation9 + $0x3c] sm:$0xf]
    %v221 = vunpack.c.l.b16 %v189
    %v222 = vunpack.c.l.b16 %v190
    %v223 = vunpack.c.l.b16 %v191
    %v224 = vunpack.c.l.b16 %v192
    %v225 = vunpack.c.l.b16 %v193
    %v226 = vunpack.c.l.b16 %v194
    %v227 = vunpack.c.l.b16 %v195
    %v228 = vunpack.c.l.b16 %v196
    %v229 = vunpack.c.l.b16 %v197
    %v230 = vunpack.c.l.b16 %v198
    %v231 = vunpack.c.l.b16 %v199
    %v232 = vunpack.c.l.b16 %v200
    %v233 = vunpack.c.l.b16 %v201
    %v234 = vunpack.c.l.b16 %v202
    %v235 = vunpack.c.l.b16 %v203
    %v236 = vunpack.c.l.b16 %v204
    %v237 = vpack.c.b16 %v222, %v221
    %v238 = vpack.c.b16 %v224, %v223
    %v239 = vpack.c.b16 %v226, %v225
    %v240 = vpack.c.b16 %v228, %v227
    %v241 = vpack.c.b16 %v230, %v229
    %v242 = vpack.c.b16 %v232, %v231
    %v243 = vpack.c.b16 %v234, %v233
    %v244 = vpack.c.b16 %v236, %v235
    %253 = vmatprep.subr.bf16.mxu0 0
    %254 = vmatpush1.bf16.xpose.msra.mxu0 %v237
    %255 = vmatprep.subr.bf16.mxu0 0
    %256 = vmatpush1.bf16.xpose.msra.mxu0 %v238
    %257 = vmatprep.subr.bf16.mxu0 0
    %258 = vmatpush1.bf16.xpose.msra.mxu0 %v239
    %259 = vmatprep.subr.bf16.mxu0 0
    %260 = vmatpush1.bf16.xpose.msra.mxu0 %v240
    %261 = vmatprep.subr.bf16.mxu0 0
    %262 = vmatpush1.bf16.xpose.msra.mxu0 %v241
    %263 = vmatprep.subr.bf16.mxu0 0
    %264 = vmatpush1.bf16.xpose.msra.mxu0 %v242
    %265 = vmatprep.subr.bf16.mxu0 0
    %266 = vmatpush1.bf16.xpose.msra.mxu0 %v243
    %267 = vmatprep.subr.bf16.mxu0 0
    %268 = vmatpush1.bf16.xpose.msra.mxu0 %v244
    %269 = vmatprep.subr.bf16.mxu0 0
    %270 = vmatpush1.bf16.xpose.msra.mxu0 0
    %271 = vmatprep.subr.bf16.mxu0 0
    %272 = vmatpush1.bf16.xpose.msra.mxu0 0
    %273 = vmatprep.subr.bf16.mxu0 0
    %274 = vmatpush1.bf16.xpose.msra.mxu0 0
    %275 = vmatprep.subr.bf16.mxu0 0
    %276 = vmatpush1.bf16.xpose.msra.mxu0 0
    %277 = vmatprep.subr.bf16.mxu0 0
    %278 = vmatpush1.bf16.xpose.msra.mxu0 0
    %279 = vmatprep.subr.bf16.mxu0 0
    %280 = vmatpush1.bf16.xpose.msra.mxu0 0
    %281 = vmatprep.subr.bf16.mxu0 0
    %282 = vmatpush1.bf16.xpose.msra.mxu0 0
    %283 = vmatprep.subr.bf16.mxu0 0
    %284 = vmatpush1.bf16.xpose.msra.mxu0 0
    %285 = vmatprep.mubr.bf16.mxu0 0
    %286 = vmatmul.mubr.bf16.gmra.mrb[0].mxu0 %v188
    %v287 = vpop.f32.mrb[0].mxu0
    %v288 = vadd.f32 0.0, %v287
    %v289 = vpop.f32.mrb[0].mxu0
    %v290 = vpop.f32.mrb[0].mxu0
    %v291 = vpop.f32.mrb[0].mxu0
    %292 = vdwg.mxu0
    %v293 = vadd.f32 %v187, %v288
    %294 = vst [vmem:[#allocation3] sm:$0xff] %v293
    // Predicated region
    $region42: #{tpu_custom_call.1} parent=1 // pred_check
      %p295 = pneg %p64
    $region43: #{tpu_custom_call.1} parent=1 // pred_check_branch
      %297 = sbr.rel (%p295) target = $region45
    $region44: #{tpu_custom_call.1} parent=1 // pred_region
      %v298 = vld [vmem:[#allocation2] sm:$0xff]
      %v299 = vld [vmem:[%s4] sm:$0x1]
      %v300 = vld [vmem:[#allocation3] sm:$0xff]
      %v302 = vlaneseq
      %v303 = vshrl.u32 %v302, 7
      %v304 = vsub.s32 0, %v303
      %v305 = vrot.slane %v299, %v304
      %v307 = vmul.f32 %v305, %v300
      %v308 = vadd.f32 %v298, %v307
      %v309 = vld [vmem:[%s5] sm:$0x1]
      %v311 = vlaneseq
      %v312 = vshrl.u32 %v311, 7
      %v313 = vsub.s32 0, %v312
      %v314 = vrot.slane %v309, %v313
      %v316 = vadd.f32 %v308, %v314
      %317 = vst [vmem:[#allocation10] sm:$0xff] %v316
    $region45: #{tpu_custom_call.1} parent=1 // pred_fallthru
      _
    // Predicated region
    $region46: #{tpu_custom_call.1} parent=1 // pred_check
      _
    $region47: #{tpu_custom_call.1} parent=1 // pred_check_branch
      %319 = sbr.rel (0) target = $region49
    $region48: #{tpu_custom_call.1} parent=1 // pred_region
      %s321 = ssub.s32 128, 128
      %322 = vsyncadd [#allocation6], %s321
      %s324 = sshll.u32 [#allocation10], 4
      %s325 = int_to_ptr.vmem [resolvable:$true] %s324
      %327 = dma.vmem_to_hbm [thread:$0]  %s325, 128, %s6, [#allocation6]
    $region49: #{tpu_custom_call.1} parent=1 // pred_fallthru
      _
    // Predicated region
    $region50: #{tpu_custom_call.1} parent=1 // pred_check
      _
    $region51: #{tpu_custom_call.1} parent=1 // pred_check_branch
      %329 = sbr.rel (0) target = $region53
    $region52: #{tpu_custom_call.1} parent=1 // pred_region
      %330 = dma.done [#allocation6], 128
    $region53: #{tpu_custom_call.1} parent=1 // pred_fallthru
      _
    %331 = vsyncpa [#allocation5], 1
    %332 = vsyncpa [#allocation8], 1
    %333 = vsyncpa [#allocation6], 1

</llo_original>
